<compile_context>
chip_gen: v5e
topology: v5e:2x2
jax: 0.10.0
libtpu: 0.0.40
codegen_flags: <defaults>
</compile_context>

<pallas_src>
import functools

import jax
import jax.numpy as jnp
from jax import lax
from jax.experimental import pallas as pl
from jax.experimental.pallas import tpu as pltpu

BN_EPS = 1e-5


# ---------------------------------------------------------------------------
# Kernel bodies
# ---------------------------------------------------------------------------
def _mlp_head(xn, w_ref, f32_ref, out_ref, *, f, f_pad, h1, h2):
    """Shared MLP: fc_in(+folded BN affine) -> ReLU -> fc1 -> ReLU -> fc_out.

    Stores the result lane-dense as (1, B).
    bf16 MXU operands, f32 accumulation; all elementwise math stays f32.
    """
    w = w_ref[...]            # (f_pad + h1, lanes) bf16 slab
    c = f32_ref[...]          # (4, lanes) f32 slab: [b_in_folded, b1, b_out, w_out_row]

    # fc_in (BN gamma/beta already folded into the weights/bias) + ReLU.
    a1 = jnp.dot(xn.astype(jnp.bfloat16), w[:f, :h1],
                 preferred_element_type=jnp.float32)
    a1 = jnp.maximum(a1 + c[0:1, :h1], 0.0)

    # fc1 + ReLU.
    a2 = jnp.dot(a1.astype(jnp.bfloat16), w[f_pad:f_pad + h1, :h2],
                 preferred_element_type=jnp.float32)
    a2 = jnp.maximum(a2 + c[1:2, :h2], 0.0)

    # fc_out: width-1 output -> VPU multiply + XLU lane reduce (no MXU),
    # written lane-dense as (1, B).
    res = jnp.sum(a2 * c[3:4, :h2], axis=-1)            # (B,)
    out_ref[...] = res[None, :] + c[2:3, 0:1]           # (1, B)


def critic_fused_kernel(x_ref, w_ref, f32_ref, out_ref, *, f, f_pad, h1, h2, inv_b):
    """Grid-less fused kernel: full-batch BN stats + MLP in one pass."""
    x = x_ref[...].astype(jnp.float32)                  # (B, F)

    # One-pass BatchNorm1d training statistics (batch mean, biased variance),
    # f32 accumulation, variance clamped to >= 0 for numerical safety.
    s = jnp.sum(x, axis=0, keepdims=True)               # (1, F)
    ss = jnp.sum(x * x, axis=0, keepdims=True)          # (1, F)
    mean = s * inv_b
    var = jnp.maximum(ss * inv_b - mean * mean, 0.0)
    xn = (x - mean) * lax.rsqrt(var + BN_EPS)

    _mlp_head(xn, w_ref, f32_ref, out_ref, f=f, f_pad=f_pad, h1=h1, h2=h2)


def critic_mlp_kernel(ss_ref, x_ref, w_ref, f32_ref, out_ref, *, f, f_pad, h1, h2):
    """Batch-gridded kernel: BN stats hoisted; per-tile normalize + MLP."""
    x = x_ref[...].astype(jnp.float32)                  # (TB, F)
    xn = x * ss_ref[0:1, :] + ss_ref[1:2, :]            # scale / shift from full-batch stats
    _mlp_head(xn, w_ref, f32_ref, out_ref, f=f, f_pad=f_pad, h1=h1, h2=h2)


# ---------------------------------------------------------------------------
# Parameter packing (call ONCE per parameter update; result is cached/reused)
# ---------------------------------------------------------------------------
def pack_params(params):
    """Fold BN affine into fc_in and pack everything into two slabs.

    Returns (w_slab_bf16, f32_slab, meta).  Hoisted out of the per-forward
    path: the gamma fold, bias packing and bf16 casts happen once per
    parameter update, not per call.
    """
    gamma, beta = params["gamma"], params["beta"]        # (1, F)
    w_in, b_in = params["w_in"], params["b_in"]          # (F, H1), (1, H1)
    w1, b1 = params["w1"], params["b1"]                  # (H1, H2), (1, H2)
    w_out, b_out = params["w_out"], params["b_out"]      # (H2, 1), (1, 1)

    f, h1 = w_in.shape
    h2 = w1.shape[1]
    lanes = max(h1, h2)
    f_pad = ((f + 15) // 16) * 16   # align w1 start to a bf16 sublane tile

    # (xn * gamma + beta) @ W + b == xn @ (gamma^T * W) + (beta @ W + b)
    w_in_f = gamma.reshape(-1, 1) * w_in
    b_in_f = beta @ w_in + b_in

    w_slab = jnp.zeros((f_pad + h1, lanes), jnp.float32)
    w_slab = w_slab.at[:f, :h1].set(w_in_f)
    w_slab = w_slab.at[f_pad:f_pad + h1, :h2].set(w1)
    w_slab = w_slab.astype(jnp.bfloat16)                 # MXU operands -> bf16

    f32_slab = jnp.zeros((4, lanes), jnp.float32)
    f32_slab = f32_slab.at[0, :h1].set(b_in_f[0])        # folded fc_in bias
    f32_slab = f32_slab.at[1, :h2].set(b1[0])            # fc1 bias
    f32_slab = f32_slab.at[2, 0].set(b_out[0, 0])        # fc_out bias
    f32_slab = f32_slab.at[3, :h2].set(w_out[:, 0])      # fc_out weight row

    meta = dict(f=int(f), f_pad=int(f_pad), h1=int(h1), h2=int(h2))
    return w_slab, f32_slab, meta


def _cost_estimate(b, meta, *arrays):
    f, h1, h2 = meta["f"], meta["h1"], meta["h2"]
    flops = 2 * b * (f * h1 + h1 * h2 + h2) + 6 * b * f   # matmuls + BN/ReLU elementwise
    bytes_accessed = sum(int(a.size) * a.dtype.itemsize for a in arrays) + 4 * b
    return pl.CostEstimate(flops=flops, transcendentals=f,
                           bytes_accessed=bytes_accessed)


# ---------------------------------------------------------------------------
# Forward wrappers
# ---------------------------------------------------------------------------
def critic_forward(x, packed):
    """Grid-less fused call (BN stats + MLP in one kernel). Best for small/medium B."""
    w_slab, f32_slab, meta = packed
    b = x.shape[0]
    kernel = functools.partial(critic_fused_kernel, inv_b=1.0 / b, **meta)
    vmem = pl.BlockSpec(memory_space=pltpu.MemorySpace.VMEM)
    out = pl.pallas_call(
        kernel,
        out_shape=jax.ShapeDtypeStruct((1, b), jnp.float32),   # lane-dense output
        in_specs=[vmem, vmem, vmem],
        out_specs=vmem,
        cost_estimate=_cost_estimate(b, meta, x, w_slab, f32_slab),
    )(x, w_slab, f32_slab)
    return out.reshape(b, 1)


def critic_forward_batched(x, packed, *, block_b=128):
    """Large-batch / v7x path: BN stats hoisted (full batch, same math), MLP
    kernel tiled over batch with a parallel grid (shards across TensorCores,
    keeps VMEM bounded as B grows)."""
    w_slab, f32_slab, meta = packed
    b, f = x.shape

    # Phase 1: BatchNorm statistics over the FULL batch (plain XLA, one pass).
    mean = jnp.mean(x, axis=0, keepdims=True)
    var = jnp.maximum(jnp.mean(x * x, axis=0, keepdims=True) - mean * mean, 0.0)
    inv = lax.rsqrt(var + BN_EPS)
    scale_shift = jnp.concatenate([inv, -mean * inv], axis=0)    # (2, F)

    tb = b if b <= block_b else block_b
    assert b % tb == 0, "batch must be a multiple of the batch tile"
    kernel = functools.partial(critic_mlp_kernel, **meta)
    out = pl.pallas_call(
        kernel,
        out_shape=jax.ShapeDtypeStruct((1, b), jnp.float32),
        grid=(b // tb,),
        in_specs=[
            pl.BlockSpec((2, f), lambda i: (0, 0)),              # scale/shift (shared)
            pl.BlockSpec((tb, f), lambda i: (i, 0)),             # batch tile of x
            pl.BlockSpec(w_slab.shape, lambda i: (0, 0)),        # bf16 weight slab
            pl.BlockSpec(f32_slab.shape, lambda i: (0, 0)),      # f32 bias/fc_out slab
        ],
        out_specs=pl.BlockSpec((1, tb), lambda i: (0, i)),        # lane-dense tile
        compiler_params=pltpu.CompilerParams(dimension_semantics=("parallel",)),
        cost_estimate=_cost_estimate(b, meta, x, w_slab, f32_slab),
    )(scale_shift, x, w_slab, f32_slab)
    return out.reshape(b, 1)


# ---------------------------------------------------------------------------
# Init and references
# ---------------------------------------------------------------------------
def init_params(key, in_dim, h1, h2):
    """PyTorch-default init: BN weight=1, bias=0; Linear U(-1/sqrt(fan_in), ...)."""
    ks = jax.random.split(key, 6)

    def lin(kw, kb, fan_in, fan_out):
        bound = 1.0 / jnp.sqrt(jnp.float32(fan_in))
        w = jax.random.uniform(kw, (fan_in, fan_out), jnp.float32, -bound, bound)
        b = jax.random.uniform(kb, (1, fan_out), jnp.float32, -bound, bound)
        return w, b

    w_in, b_in = lin(ks[0], ks[1], in_dim, h1)
    w1, b1 = lin(ks[2], ks[3], h1, h2)
    w_out, b_out = lin(ks[4], ks[5], h2, 1)
    return {
        "gamma": jnp.ones((1, in_dim), jnp.float32),
        "beta": jnp.zeros((1, in_dim), jnp.float32),
        "w_in": w_in, "b_in": b_in,
        "w1": w1, "b1": b1,
        "w_out": w_out, "b_out": b_out,
    }


def reference_forward_f32(x, params):
    """Pure f32 reference == the PyTorch module math (training-mode BN)."""
    mean = jnp.mean(x, axis=0, keepdims=True)
    var = jnp.mean((x - mean) ** 2, axis=0, keepdims=True)
    xn = (x - mean) / jnp.sqrt(var + BN_EPS) * params["gamma"] + params["beta"]
    h = jnp.maximum(xn @ params["w_in"] + params["b_in"], 0.0)
    h = jnp.maximum(h @ params["w1"] + params["b1"], 0.0)
    return h @ params["w_out"] + params["b_out"]


def reference_kernel_math(x, packed):
    """Mirrors kernel numerics (folded BN, one-pass stats, bf16 MXU operands)."""
    w_slab, f32_slab, meta = packed
    f, f_pad, h1, h2 = meta["f"], meta["f_pad"], meta["h1"], meta["h2"]
    w_in = w_slab[:f, :h1]
    w1 = w_slab[f_pad:f_pad + h1, :h2]
    mean = jnp.mean(x, axis=0, keepdims=True)
    var = jnp.maximum(jnp.mean(x * x, axis=0, keepdims=True) - mean * mean, 0.0)
    xn = (x - mean) * lax.rsqrt(var + BN_EPS)
    a1 = jnp.maximum(jnp.dot(xn.astype(jnp.bfloat16), w_in,
                             preferred_element_type=jnp.float32) + f32_slab[0:1, :h1], 0.0)
    a2 = jnp.maximum(jnp.dot(a1.astype(jnp.bfloat16), w1,
                             preferred_element_type=jnp.float32) + f32_slab[1:2, :h2], 0.0)
    return (jnp.sum(a2 * f32_slab[3:4, :h2], axis=-1, keepdims=True)
            + f32_slab[2, 0])


# ---------------------------------------------------------------------------
if __name__ == "__main__":
    # CriticNet-consistent small shapes:
    #   state_size=8, action_size=2, num_agents=2 -> in_dim = (8+2)*2 = 20
    #   hidden1=32, hidden2=16, batch=16.
    state_size, action_size, num_agents = 8, 2, 2
    in_dim = (state_size + action_size) * num_agents
    hidden1, hidden2 = 32, 16
    batch = 16

    key = jax.random.PRNGKey(0)
    k_x, k_p, k_xl = jax.random.split(key, 3)
    x = jax.random.normal(k_x, (batch, in_dim), jnp.float32)
    params = init_params(k_p, in_dim, hidden1, hidden2)

    # Hoisted: fold/pack/bf16-cast once per parameter update, reused per call.
    packed = pack_params(params)

    # --- Path 1: fused grid-less kernel (small batch). ---
    out = jax.block_until_ready(critic_forward(x, packed))
    assert out.shape == (batch, 1)
    assert jnp.allclose(out, reference_kernel_math(x, packed), atol=2e-3, rtol=2e-3), \
        "fused kernel mismatch vs bf16-matmul JAX reference"
    assert jnp.allclose(out, reference_forward_f32(x, params), atol=5e-2, rtol=5e-2), \
        "fused kernel mismatch vs f32 module reference"

    # --- Path 2: hoisted-stats + parallel batch grid (2 tiles of 128 rows). ---
    batch_l = 256
    xl = jax.random.normal(k_xl, (batch_l, in_dim), jnp.float32)
    out_l = jax.block_until_ready(critic_forward_batched(xl, packed, block_b=128))
    assert out_l.shape == (batch_l, 1)
    assert jnp.allclose(out_l, reference_kernel_math(xl, packed), atol=2e-3, rtol=2e-3), \
        "batched kernel mismatch vs bf16-matmul JAX reference"
    assert jnp.allclose(out_l, reference_forward_f32(xl, params), atol=5e-2, rtol=5e-2), \
        "batched kernel mismatch vs f32 module reference"

    print("KERNEL_OK")
</pallas_src>

<mosaic_0001>
module attributes {stable_mosaic.version = 11 : i64} {
  func.func @critic_fused_kernel(%arg0: memref<16x20xf32, #tpu.memory_space<vmem>>, %arg1: memref<64x32xbf16, #tpu.memory_space<vmem>>, %arg2: memref<4x32xf32, #tpu.memory_space<vmem>>, %arg3: memref<1x16xf32, #tpu.memory_space<vmem>>) attributes {dimension_semantics = [], scalar_prefetch = 0 : i64, scratch_operands = 0 : i64, tpu.core_type = #tpu.core_type<tc>} {
    %c0 = arith.constant 0 : index
    %c0_0 = arith.constant 0 : index
    %0 = vector.load %arg0[%c0, %c0_0] : memref<16x20xf32, #tpu.memory_space<vmem>>, vector<16x20xf32>
    %cst = arith.constant dense<0.000000e+00> : vector<20xf32>
    %1 = vector.multi_reduction <add>, %0, %cst [0] : vector<16x20xf32> to vector<20xf32>
    %2 = vector.shape_cast %1 : vector<20xf32> to vector<1x20xf32>
    %3 = arith.mulf %0, %0 : vector<16x20xf32>
    %cst_1 = arith.constant dense<0.000000e+00> : vector<20xf32>
    %4 = vector.multi_reduction <add>, %3, %cst_1 [0] : vector<16x20xf32> to vector<20xf32>
    %5 = vector.shape_cast %4 : vector<20xf32> to vector<1x20xf32>
    %cst_2 = arith.constant 6.250000e-02 : f32
    %6 = vector.broadcast %cst_2 : f32 to vector<1x20xf32>
    %7 = arith.mulf %2, %6 : vector<1x20xf32>
    %cst_3 = arith.constant 6.250000e-02 : f32
    %8 = vector.broadcast %cst_3 : f32 to vector<1x20xf32>
    %9 = arith.mulf %5, %8 : vector<1x20xf32>
    %10 = arith.mulf %7, %7 : vector<1x20xf32>
    %11 = arith.subf %9, %10 : vector<1x20xf32>
    %cst_4 = arith.constant 0.000000e+00 : f32
    %12 = vector.broadcast %cst_4 : f32 to vector<1x20xf32>
    %13 = arith.maximumf %11, %12 : vector<1x20xf32>
    %14 = vector.broadcast %7 : vector<1x20xf32> to vector<16x20xf32>
    %15 = arith.subf %0, %14 : vector<16x20xf32>
    %cst_5 = arith.constant 9.99999974E-6 : f32
    %16 = vector.broadcast %cst_5 : f32 to vector<1x20xf32>
    %17 = arith.addf %13, %16 : vector<1x20xf32>
    %18 = math.rsqrt %17 : vector<1x20xf32>
    %19 = vector.broadcast %18 : vector<1x20xf32> to vector<16x20xf32>
    %20 = arith.mulf %15, %19 : vector<16x20xf32>
    %c0_6 = arith.constant 0 : index
    %c0_7 = arith.constant 0 : index
    %21 = vector.load %arg1[%c0_6, %c0_7] : memref<64x32xbf16, #tpu.memory_space<vmem>>, vector<64x32xbf16>
    %c0_8 = arith.constant 0 : index
    %c0_9 = arith.constant 0 : index
    %22 = vector.load %arg2[%c0_8, %c0_9] : memref<4x32xf32, #tpu.memory_space<vmem>>, vector<4x32xf32>
    %23 = arith.truncf %20 : vector<16x20xf32> to vector<16x20xbf16>
    %24 = vector.extract_strided_slice %21 {offsets = [0, 0], sizes = [20, 32], strides = [1, 1]} : vector<64x32xbf16> to vector<20x32xbf16>
    %cst_10 = arith.constant dense<0.000000e+00> : vector<16x32xf32>
    %25 = tpu.matmul %23, %24, %cst_10 {dimension_numbers = #tpu.dot_dimension_numbers<[1], [0], [0], [1], [0, 0, 1, 1], [], []>} : vector<16x20xbf16>, vector<20x32xbf16>, vector<16x32xf32> -> vector<16x32xf32>
    %26 = vector.extract_strided_slice %22 {offsets = [0, 0], sizes = [1, 32], strides = [1, 1]} : vector<4x32xf32> to vector<1x32xf32>
    %27 = vector.broadcast %26 : vector<1x32xf32> to vector<16x32xf32>
    %28 = arith.addf %25, %27 : vector<16x32xf32>
    %cst_11 = arith.constant 0.000000e+00 : f32
    %29 = vector.broadcast %cst_11 : f32 to vector<16x32xf32>
    %30 = arith.maximumf %28, %29 : vector<16x32xf32>
    %31 = arith.truncf %30 : vector<16x32xf32> to vector<16x32xbf16>
    %32 = vector.extract_strided_slice %21 {offsets = [32, 0], sizes = [32, 16], strides = [1, 1]} : vector<64x32xbf16> to vector<32x16xbf16>
    %cst_12 = arith.constant dense<0.000000e+00> : vector<16x16xf32>
    %33 = tpu.matmul %31, %32, %cst_12 {dimension_numbers = #tpu.dot_dimension_numbers<[1], [0], [0], [1], [0, 0, 1, 1], [], []>} : vector<16x32xbf16>, vector<32x16xbf16>, vector<16x16xf32> -> vector<16x16xf32>
    %34 = vector.extract_strided_slice %22 {offsets = [1, 0], sizes = [1, 16], strides = [1, 1]} : vector<4x32xf32> to vector<1x16xf32>
    %35 = vector.broadcast %34 : vector<1x16xf32> to vector<16x16xf32>
    %36 = arith.addf %33, %35 : vector<16x16xf32>
    %cst_13 = arith.constant 0.000000e+00 : f32
    %37 = vector.broadcast %cst_13 : f32 to vector<16x16xf32>
    %38 = arith.maximumf %36, %37 : vector<16x16xf32>
    %39 = vector.extract_strided_slice %22 {offsets = [3, 0], sizes = [1, 16], strides = [1, 1]} : vector<4x32xf32> to vector<1x16xf32>
    %40 = vector.broadcast %39 : vector<1x16xf32> to vector<16x16xf32>
    %41 = arith.mulf %38, %40 : vector<16x16xf32>
    %cst_14 = arith.constant dense<0.000000e+00> : vector<16xf32>
    %42 = vector.multi_reduction <add>, %41, %cst_14 [1] : vector<16x16xf32> to vector<16xf32>
    %43 = vector.shape_cast %42 : vector<16xf32> to vector<1x16xf32>
    %44 = vector.extract_strided_slice %22 {offsets = [2, 0], sizes = [1, 1], strides = [1, 1]} : vector<4x32xf32> to vector<1x1xf32>
    %45 = vector.broadcast %44 : vector<1x1xf32> to vector<1x16xf32>
    %46 = arith.addf %43, %45 : vector<1x16xf32>
    %c0_15 = arith.constant 0 : index
    %c0_16 = arith.constant 0 : index
    %47 = vector.load %arg3[%c0_15, %c0_16] : memref<1x16xf32, #tpu.memory_space<vmem>>, vector<1x16xf32>
    tpu.vector_store %arg3[%c0_15, %c0_16], %46 {strides = array<i32>} : memref<1x16xf32, #tpu.memory_space<vmem>>, vector<1x16xf32>,
    return
  }
}

</mosaic_0001>

<llo_original>
// kernel: tpu_custom_call.1
$region0: #{tpu_custom_call.1}
  #allocation0 [shape = 'u32[]', space=smem, size = 0x4, offset = 0x4, fixed_abs, tag = 'smem constant byte address 0x4 - core index']
  #allocation1 [shape = 'u32[72,128]{1,0:T(1,128)}', space=vmem, size = 0x9000, scoped, tag = 'internal scratch']
  %s0 = inlined_call_operand.vmem [shape: f32[16,20], index: 0, kind: input, shape index: {}]
  %s1 = inlined_call_operand.vmem [shape: bf16[64,32], index: 1, kind: input, shape index: {}]
  %s2 = inlined_call_operand.vmem [shape: f32[4,32], index: 2, kind: input, shape index: {}]
  %s3 = inlined_call_operand.hbm [shape: f32[1,16], index: 3, kind: output, shape index: {}]
  %s4 = sld [smem:[#allocation0]]
  $region22: #{tpu_custom_call.1} parent=0
    _
  %s6 = ssub.s32 1, %s4
  %s7 = scalar_select 0, %s6, %s4
  $region1: #{tpu_custom_call.1} parent=0
    #allocation2 [shape = 'u8[512]{0}', space=vmem, size = 0x400, scoped, tag = 'output window, operand 0, single buffered']
    #allocation3 [shape = 's32[1]{0}', space=sflag, size = 0x4, scoped, tag = 'scoped memory for tpu_custom_call.1']
    %8 = vsyncpa [#allocation3], 0
    // Predicated region
    $region2: #{tpu_custom_call.1} parent=1 // pred_check
      _
    $region3: #{tpu_custom_call.1} parent=1 // pred_check_branch
      %10 = sbr.rel (0) target = $region5
    $region4: #{tpu_custom_call.1} parent=1 // pred_region
      _
    $region5: #{tpu_custom_call.1} parent=1 // pred_fallthru
      _
    // Predicated region
    $region6: #{tpu_custom_call.1} parent=1 // pred_check
      _
    $region7: #{tpu_custom_call.1} parent=1 // pred_check_branch
      %12 = sbr.rel (0) target = $region9
    $region8: #{tpu_custom_call.1} parent=1 // pred_region
      _
    $region9: #{tpu_custom_call.1} parent=1 // pred_fallthru
      _
    // Predicated region
    $region10: #{tpu_custom_call.1} parent=1 // pred_check
      _
    $region11: #{tpu_custom_call.1} parent=1 // pred_check_branch
      %14 = sbr.rel (0) target = $region13
    $region12: #{tpu_custom_call.1} parent=1 // pred_region
      _
    $region13: #{tpu_custom_call.1} parent=1 // pred_fallthru
      _
    %v16 = vld [vmem:[%s0] sm:$0xff]
    %v17 = vld [vmem:[%s0 + $0x8] sm:$0xff]
    %vm18 = vcmask 162816
    %v19 = vsel %vm18, %v16, 0.0
    %v20 = vsel %vm18, %v17, 0.0
    %v21 = vadd.f32 %v19, %v20
    %v22 = vrot.slane %v21, 4
    %v23 = vadd.f32 %v21, %v22
    %v24 = vrot.slane %v23, 2
    %v25 = vadd.f32 %v23, %v24
    %v26 = vrot.slane %v25, 1
    %v27 = vadd.f32 %v25, %v26
    %v28 = vmul.f32 %v16, %v16
    %v29 = vmul.f32 %v17, %v17
    %v30 = vsel %vm18, %v28, 0.0
    %v31 = vsel %vm18, %v29, 0.0
    %v32 = vadd.f32 %v30, %v31
    %v33 = vrot.slane %v32, 4
    %v34 = vadd.f32 %v32, %v33
    %v35 = vrot.slane %v34, 2
    %v36 = vadd.f32 %v34, %v35
    %v37 = vrot.slane %v36, 1
    %v38 = vadd.f32 %v36, %v37
    %v39 = vmul.f32 %v27, 0.0625
    %v40 = vmul.f32 %v38, 0.0625
    %v41 = vmul.f32 %v39, %v39
    %v42 = vsub.f32 %v40, %v41
    %v43 = vmax.f32 %v42, 0.0
    %v44 = vsub.f32 %v16, %v39
    %v45 = vsub.f32 %v17, %v39
    %v46 = vadd.f32 %v43, 1e-05
    %v47 = vrsqrt.pop %v46
    %v48 = vmul.f32 %v47, %v46
    %v49 = vmul.f32 %v48, %v47
    %v50 = vmul.f32 0.5, %v49
    %v51 = vsub.f32 1.5, %v50
    %v52 = vmul.f32 %v47, %v51
    %vm53 = vweird.f32 %v46
    %vm54 = vweird.f32 %v47
    %vm55 = vmor %vm53, %vm54
    %v56 = vsel %vm55, %v47, %v52
    %v57 = vmul.f32 %v44, %v56
    %v58 = vmul.f32 %v45, %v56
    %v59 = vld [vmem:[%s1] sm:$0xf]
    %v60 = vld [vmem:[%s1 + $0x4] sm:$0xf]
    %v61 = vld [vmem:[%s1 + $0x8] sm:$0xf]
    %v62 = vld [vmem:[%s1 + $0x10] sm:$0xf]
    %v63 = vld [vmem:[%s1 + $0x14] sm:$0xf]
    %v64 = vld [vmem:[%s1 + $0x18] sm:$0xf]
    %v65 = vld [vmem:[%s1 + $0x1c] sm:$0xf]
    %v66 = vld [vmem:[%s2] sm:$0xf]
    %v67 = vpack.c.bf16 %v58, %v57
    %v68 = vperm.slane %v66, 0
    %v72 = vunpack.c.l.b16 %v59
    %v73 = vunpack.c.l.b16 %v60
    %v74 = vunpack.c.l.b16 %v61
    %v75 = vpack.c.b16 %v73, %v72
    %v76 = vpack.c.b16 %v74, %v74
    %v79 = vsel %vm18, %v67, 0
    %vm81 = vcmask 1041408
    %v83 = vsel %vm81, %v76, 0
    %85 = vmatpush.bf16.msra.mxu0 0
    %86 = vmatpush.bf16.msra.mxu0 0
    %87 = vmatpush.bf16.msra.mxu0 0
    %88 = vmatpush.bf16.msra.mxu0 0
    %89 = vmatpush.bf16.msra.mxu0 0
    %90 = vmatpush.bf16.msra.mxu0 0
    %91 = vmatpush.bf16.msra.mxu0 %v83
    %92 = vmatpush.bf16.msra.mxu0 %v75
    %93 = vmatmul.bf16.gmra.mxu0 %v79
    %v94 = vpop.f32.mrf.mxu0
    %v95 = vadd.f32 %v68, %v94
    %v96 = vpop.f32.mrf.mxu0
    %v97 = vadd.f32 %v68, %v96
    %98 = vdwg.mxu0
    %v99 = vmax.f32 %v95, 0.0
    %v100 = vmax.f32 %v97, 0.0
    %v101 = vpack.c.bf16 %v100, %v99
    %v102 = vperm.slane %v66, 1
    %v107 = vunpack.c.l.b16 %v62
    %v108 = vunpack.c.l.b16 %v63
    %v109 = vunpack.c.l.b16 %v64
    %v110 = vunpack.c.l.b16 %v65
    %v111 = vpack.c.b16 %v108, %v107
    %v112 = vpack.c.b16 %v110, %v109
    %vm115 = vcmask 261120
    %v117 = vsel %vm115, %v101, 0
    %119 = vmatpush.bf16.msra.mxu0 0
    %120 = vmatpush.bf16.msra.mxu0 0
    %121 = vmatpush.bf16.msra.mxu0 0
    %122 = vmatpush.bf16.msra.mxu0 0
    %123 = vmatpush.bf16.msra.mxu0 0
    %124 = vmatpush.bf16.msra.mxu0 0
    %125 = vmatpush.bf16.msra.mxu0 %v112
    %126 = vmatpush.bf16.msra.mxu0 %v111
    %127 = vmatmul.bf16.gmra.mxu0 %v117
    %v128 = vpop.f32.mrf.mxu0
    %v129 = vadd.f32 %v102, %v128
    %v130 = vpop.f32.mrf.mxu0
    %v131 = vadd.f32 %v102, %v130
    %132 = vdwg.mxu0
    %v133 = vmax.f32 %v129, 0.0
    %v134 = vmax.f32 %v131, 0.0
    %v135 = vperm.slane %v66, 3
    %v136 = vmul.f32 %v133, %v135
    %v137 = vmul.f32 %v134, %v135
    %vm138 = vcmask 130048
    %v139 = vsel %vm138, %v136, 0.0
    %140 = vadd.xlane.f32.xlu0 %v139
    %v141 = vpop.xlane.xlu0 %140
    %v142 = vsel %vm138, %v137, 0.0
    %143 = vadd.xlane.f32.xlu0 %v142
    %v144 = vpop.xlane.xlu0 %143
    %146 = vset.pattern.permute.xlu0 0
    %147 = vperm.xlu0 %146, %v66
    %v148 = vpop.permute.xlu0 %147
    %v149 = vperm.slane %v148, 2
    %v151 = vadd.f32 %v141, %v149
    %v152 = vadd.f32 %v144, %v149
    %155 = vset.pattern.permute.xlu0 0
    %156 = vperm.xlu0 %155, %v151
    %v157 = vpop.permute.xlu0 %156
    %158 = vset.pattern.permute.xlu0 0
    %159 = vperm.xlu0 %158, %v152
    %v160 = vpop.permute.xlu0 %159
    %v161 = vlaneseq
    %v162 = vand.u32 %v161, 127
    %v163 = vperm.slane %v157, %v162
    %v164 = vadd.s32 %v162, 4294967288
    %v165 = vperm.slane %v160, %v164
    %vm166 = vcmask 130112
    %v167 = vsel %vm166, %v165, %v163
    %vm169 = vcmask 122880
    %170 = vst.msk [vmem:[#allocation2] sm:$0x1] %vm169, %v167
    // Predicated region
    $region14: #{tpu_custom_call.1} parent=1 // pred_check
      _
    $region15: #{tpu_custom_call.1} parent=1 // pred_check_branch
      %172 = sbr.rel (0) target = $region17
    $region16: #{tpu_custom_call.1} parent=1 // pred_region
      %174 = vsyncadd [#allocation3], 0
      %s176 = sshll.u32 [#allocation2], 4
      %s177 = int_to_ptr.vmem [resolvable:$true] %s176
      %s178 = sshll.u32 %s3, 4
      %s179 = int_to_ptr.hbm [resolvable:$true] %s178
      %181 = dma.vmem_to_hbm [thread:$0]  %s177, 16, %s179, [#allocation3]
    $region17: #{tpu_custom_call.1} parent=1 // pred_fallthru
      _
    // Predicated region
    $region18: #{tpu_custom_call.1} parent=1 // pred_check
      _
    $region19: #{tpu_custom_call.1} parent=1 // pred_check_branch
      %183 = sbr.rel (0) target = $region21
    $region20: #{tpu_custom_call.1} parent=1 // pred_region
      %185 = dma.done [#allocation3], 16
    $region21: #{tpu_custom_call.1} parent=1 // pred_fallthru
      _
    %186 = vsyncpa [#allocation3], 1

</llo_original>
